<compile_context>
chip_gen: v5e
topology: v5e:2x2
jax: 0.10.0
libtpu: 0.0.40
codegen_flags: <defaults>
</compile_context>

<pallas_src>
import functools

import jax
import jax.numpy as jnp
from jax.experimental import pallas as pl
from jax.experimental.pallas import tpu as pltpu


def _replicate_pad_kernel(x_ref, o_ref, *, pad_left, pad_right, pad_top, pad_bottom):
    # x_ref: (C_BLK, H, W)   o_ref: (C_BLK, Ho, Wo)
    c_blk, H, W = x_ref.shape
    _, Ho, Wo = o_ref.shape

    x = x_ref[...]  # single full-block load

    # Build full-width rows: [left_edge * pad_left | interior | right_edge * pad_right]
    parts = []
    if pad_left > 0:
        parts.append(jnp.broadcast_to(x[:, :, 0:1], (c_blk, H, pad_left)))
    parts.append(x)
    if pad_right > 0:
        parts.append(jnp.broadcast_to(x[:, :, W - 1:W], (c_blk, H, pad_right)))
    rows = jnp.concatenate(parts, axis=-1) if len(parts) > 1 else x  # (C_BLK, H, Wo)

    # 1) Interior rows: one full-width store.
    o_ref[:, pl.ds(pad_top, H), :] = rows

    # 2) Top / bottom strips: replicate first / last full-width row.
    #    Corners come out correct for free (rows already include left/right pads).
    if pad_top > 0:
        o_ref[:, pl.ds(0, pad_top), :] = jnp.broadcast_to(
            rows[:, 0:1, :], (c_blk, pad_top, Wo))
    if pad_bottom > 0:
        o_ref[:, pl.ds(pad_top + H, pad_bottom), :] = jnp.broadcast_to(
            rows[:, H - 1:H, :], (c_blk, pad_bottom, Wo))


def _padded_plane_bytes(h, w, itemsize):
    """Physical VMEM bytes of one (h, w) slab: last two dims pad to (sublane, 128)."""
    if itemsize <= 4:
        sublane = max(8, 32 // itemsize)   # 8 f32, 16 bf16, 32 int8
    else:
        sublane = 8
    return (pl.cdiv(h, sublane) * sublane) * (pl.cdiv(w, 128) * 128) * itemsize


def _pick_channel_block(nc, plane_bytes):
    """Choose planes-per-block.

    plane_bytes = physically padded VMEM bytes of one input plane + one output
    plane.  Returns c_blk; the caller zero-pads the plane axis if c_blk does
    not divide nc.
    """
    BUDGET = 12 << 20        # per-block (in+out) padded footprint; x2 when double-buffered
    MIN_BLOCK = 512 << 10    # don't shrink blocks below this just to add grid steps
    TARGET_BLOCKS = 8        # >= 4 steps per TensorCore on v7x

    plane_bytes = max(int(plane_bytes), 1)
    cap = min(nc, max(1, BUDGET // plane_bytes))
    by_steps = max(1, nc // TARGET_BLOCKS)
    floor_planes = max(1, MIN_BLOCK // plane_bytes)
    want = max(1, min(cap, max(by_steps, floor_planes)))

    # Largest divisor of nc <= want; prefer one yielding an even grid (v7x 2 TCs).
    best = None
    best_even = None
    for d in range(want, 0, -1):
        if nc % d == 0:
            if best is None:
                best = d
            if best_even is None and (nc // d) % 2 == 0:
                best_even = d
            if best is not None and best_even is not None:
                break
    if best is None:
        best = 1
    if best_even is not None and 2 * best_even >= best:
        best = best_even
    if 2 * best >= want:
        return best
    # No usable divisor (e.g. prime nc): take the budget-sized block and let the
    # wrapper pad the plane axis, instead of degenerating to (1, H, W) blocks.
    return want


def replicate_pad(x, padding):
    """Pallas TPU implementation of F.pad(x, padding, mode='replicate'), NCHW.

    padding = (left, right, top, bottom), static Python ints >= 0.
    """
    pad_left, pad_right, pad_top, pad_bottom = (int(p) for p in padding)
    assert min(pad_left, pad_right, pad_top, pad_bottom) >= 0
    # TODO(synk): negative padding (cropping) supported by torch replicate pad is out of scope.
    N, C, H, W = x.shape
    Ho = H + pad_top + pad_bottom
    Wo = W + pad_left + pad_right
    NC = N * C

    itemsize = jnp.dtype(x.dtype).itemsize
    plane_bytes = (_padded_plane_bytes(H, W, itemsize)
                   + _padded_plane_bytes(Ho, Wo, itemsize))
    c_blk = _pick_channel_block(NC, plane_bytes)

    num_blocks = pl.cdiv(NC, c_blk)
    if NC % c_blk != 0 and num_blocks > 1 and num_blocks % 2 == 1:
        # Already padding the plane axis: round the grid up to an even count so
        # v7x's two TensorCores stay balanced.
        num_blocks += 1
    nc_pad = num_blocks * c_blk

    x_flat = x.reshape(NC, H, W)
    if nc_pad > NC:
        x_flat = jnp.concatenate(
            [x_flat, jnp.zeros((nc_pad - NC, H, W), dtype=x.dtype)], axis=0)

    kernel = functools.partial(
        _replicate_pad_kernel,
        pad_left=pad_left, pad_right=pad_right,
        pad_top=pad_top, pad_bottom=pad_bottom,
    )

    # Double-buffered (in + out) blocks, plus headroom; 32 MiB is safe on
    # v5e/v6e (128 MiB physical) and v7x (64 MiB physical).
    need = 2 * c_blk * plane_bytes
    vmem_limit = int(min(max(32 << 20, need + (4 << 20)), 64 << 20))

    bytes_accessed = int(nc_pad * (H * W + Ho * Wo) * itemsize)

    out_flat = pl.pallas_call(
        kernel,
        out_shape=jax.ShapeDtypeStruct((nc_pad, Ho, Wo), x.dtype),
        grid_spec=pltpu.PrefetchScalarGridSpec(
            num_scalar_prefetch=0,
            grid=(num_blocks,),
            # Last two dims equal the full array dims -> no (8,128) issue; the
            # HBM side of each block DMA is fully contiguous in NCHW.
            in_specs=[pl.BlockSpec((c_blk, H, W), lambda i: (i, 0, 0))],
            out_specs=pl.BlockSpec((c_blk, Ho, Wo), lambda i: (i, 0, 0)),
        ),
        compiler_params=pltpu.CompilerParams(
            dimension_semantics=("parallel",),
            vmem_limit_bytes=vmem_limit,
        ),
        cost_estimate=pl.CostEstimate(
            flops=0, transcendentals=0, bytes_accessed=bytes_accessed),
    )(x_flat)

    if nc_pad > NC:
        out_flat = out_flat[:NC]
    return out_flat.reshape(N, C, Ho, Wo)


if __name__ == "__main__":
    key = jax.random.PRNGKey(0)
    x = jax.random.normal(key, (2, 4, 16, 16), dtype=jnp.float32)
    padding = (2, 3, 1, 2)  # (left, right, top, bottom), as in torch F.pad

    out = jax.block_until_ready(replicate_pad(x, padding))

    # Reference: replicate == edge mode.
    pad_l, pad_r, pad_t, pad_b = padding
    ref = jnp.pad(x, ((0, 0), (0, 0), (pad_t, pad_b), (pad_l, pad_r)), mode="edge")

    assert out.shape == ref.shape, (out.shape, ref.shape)
    assert jnp.allclose(out, ref), "mismatch vs reference replicate pad"
    print("KERNEL_OK")
</pallas_src>

<mosaic_0001>
module attributes {stable_mosaic.version = 11 : i64} {
  func.func @_replicate_pad_kernel(%arg0: i32, %arg1: memref<4x16x16xf32, #tpu.memory_space<vmem>>, %arg2: memref<4x19x21xf32, #tpu.memory_space<vmem>>) attributes {dimension_semantics = [#tpu.dimension_semantics<parallel>], iteration_bounds = array<i64: 2>, scalar_prefetch = 0 : i64, scratch_operands = 0 : i64, tpu.core_type = #tpu.core_type<tc>, window_params = [{transform_indices = @transform_0, window_bounds = array<i64: 4, 16, 16>}, {transform_indices = @transform_1, window_bounds = array<i64: 4, 19, 21>}]} {
    %c0 = arith.constant 0 : index
    %c0_0 = arith.constant 0 : index
    %c0_1 = arith.constant 0 : index
    %0 = vector.load %arg1[%c0, %c0_0, %c0_1] : memref<4x16x16xf32, #tpu.memory_space<vmem>>, vector<4x16x16xf32>
    %1 = vector.extract_strided_slice %0 {offsets = [0, 0, 0], sizes = [4, 16, 1], strides = [1, 1, 1]} : vector<4x16x16xf32> to vector<4x16x1xf32>
    %2 = vector.shape_cast %1 : vector<4x16x1xf32> to vector<4x16x1xf32>
    %3 = vector.broadcast %2 : vector<4x16x1xf32> to vector<4x16x2xf32>
    %4 = vector.extract_strided_slice %0 {offsets = [0, 0, 15], sizes = [4, 16, 1], strides = [1, 1, 1]} : vector<4x16x16xf32> to vector<4x16x1xf32>
    %5 = vector.shape_cast %4 : vector<4x16x1xf32> to vector<4x16x1xf32>
    %6 = vector.broadcast %5 : vector<4x16x1xf32> to vector<4x16x3xf32>
    %7 = tpu.concatenate %3, %0, %6 in 2 : vector<4x16x2xf32>, vector<4x16x16xf32>, vector<4x16x3xf32> -> vector<4x16x21xf32>
    %c0_2 = arith.constant 0 : index
    %c1 = arith.constant 1 : index
    %c0_3 = arith.constant 0 : index
    %8 = vector.load %arg2[%c0_2, %c1, %c0_3] : memref<4x19x21xf32, #tpu.memory_space<vmem>>, vector<4x16x21xf32>
    tpu.vector_store %arg2[%c0_2, %c1, %c0_3], %7 {strides = array<i32>} : memref<4x19x21xf32, #tpu.memory_space<vmem>>, vector<4x16x21xf32>,
    %9 = vector.extract_strided_slice %7 {offsets = [0, 0, 0], sizes = [4, 1, 21], strides = [1, 1, 1]} : vector<4x16x21xf32> to vector<4x1x21xf32>
    %c0_4 = arith.constant 0 : index
    %c0_5 = arith.constant 0 : index
    %c0_6 = arith.constant 0 : index
    %10 = vector.load %arg2[%c0_4, %c0_5, %c0_6] : memref<4x19x21xf32, #tpu.memory_space<vmem>>, vector<4x1x21xf32>
    tpu.vector_store %arg2[%c0_4, %c0_5, %c0_6], %9 {strides = array<i32>} : memref<4x19x21xf32, #tpu.memory_space<vmem>>, vector<4x1x21xf32>,
    %11 = vector.extract_strided_slice %7 {offsets = [0, 15, 0], sizes = [4, 1, 21], strides = [1, 1, 1]} : vector<4x16x21xf32> to vector<4x1x21xf32>
    %12 = vector.shape_cast %11 : vector<4x1x21xf32> to vector<4x1x21xf32>
    %13 = vector.broadcast %12 : vector<4x1x21xf32> to vector<4x2x21xf32>
    %c0_7 = arith.constant 0 : index
    %c17 = arith.constant 17 : index
    %c0_8 = arith.constant 0 : index
    %14 = vector.load %arg2[%c0_7, %c17, %c0_8] : memref<4x19x21xf32, #tpu.memory_space<vmem>>, vector<4x2x21xf32>
    tpu.vector_store %arg2[%c0_7, %c17, %c0_8], %13 {strides = array<i32>} : memref<4x19x21xf32, #tpu.memory_space<vmem>>, vector<4x2x21xf32>,
    return
  }
  func.func @transform_0(%arg0: i32) -> (i32, i32, i32) {
    %c0_i32 = arith.constant 0 : i32
    %c0_i32_0 = arith.constant 0 : i32
    %c0_i32_1 = arith.constant 0 : i32
    return %arg0, %c0_i32, %c0_i32_0 : i32, i32, i32
  }
  func.func @transform_1(%arg0: i32) -> (i32, i32, i32) {
    %c0_i32 = arith.constant 0 : i32
    %c0_i32_0 = arith.constant 0 : i32
    %c0_i32_1 = arith.constant 0 : i32
    return %arg0, %c0_i32, %c0_i32_0 : i32, i32, i32
  }
}

</mosaic_0001>

<llo_original>
// kernel: tpu_custom_call.1
$region0: #{tpu_custom_call.1}
  #allocation0 [shape = 'u32[]', space=smem, size = 0x4, offset = 0x4, fixed_abs, tag = 'smem constant byte address 0x4 - core index']
  #allocation1 [shape = 'u32[72,128]{1,0:T(1,128)}', space=vmem, size = 0x9000, scoped, tag = 'internal scratch']
  %s0 = inlined_call_operand.hbm [shape: f32[8,16,16], index: 0, kind: input, shape index: {}]
  %s1 = inlined_call_operand.vmem [shape: f32[8,19,21], index: 1, kind: output, shape index: {}]
  %s2 = sld [smem:[#allocation0]]
  $region41: #{tpu_custom_call.1} parent=0
    _
  %s4 = ssub.s32 1, %s2
  %s5 = scalar_select 0, %s4, %s2
  $region1: #{tpu_custom_call.1} parent=0
    #allocation2 [shape = 'u8[65536]{0}', space=vmem, size = 0x10000, scoped, tag = 'input window, operand 0']
    #allocation3 [shape = 's32[2]{0}', space=sflag, size = 0x8, scoped, tag = 'scoped memory for tpu_custom_call.1']
    %6 = vsyncpa [#allocation3], 0
    %s7 = scalar_lea.sflag [#allocation3], 1
    %8 = vsyncpa %s7, 0
    loop: start=0, step=1, limit=4
    $region2: #{tpu_custom_call.1} parent=1 // loop_pre_header
      _
    $region3: #{tpu_custom_call.1} parent=1 // loop_header
      %s10 = sphi 0, %s14
      %p11 = scmp.ge.s32.totalorder %s10, 4
      %s20 = sphi 0, %s22
      %s23 = sphi 0, %s20
      %s24 = sphi 0, %s23
      %s40 = sphi 0, %s24
      %s46 = sphi 0, %s48
      %s49 = sphi 0, %s46
      %s50 = sphi 0, %s49
      %s66 = sphi 0, %s50
    $region4: #{tpu_custom_call.1} parent=1 // loop_header_branch
      %13 = sbr.rel (%p11) target = $region8
    $region5: #{tpu_custom_call.1} parent=1 // loop_body
      %s15 = ssub.s32 %s10, 1
      %s16 = ssub.s32 %s10, 2
      %s17 = sadd.s32 %s10, 1
      %s18 = ssub.s32 %s10, %s17
      %p19 = scmp.eq.s32.totalorder %s18, 0
      %s21 = sadd.s32 %s20, 1
      %s22 = scalar_select %p19, %s20, %s21
      %p25 = pneg %p19
      %p26 = scmp.eq.s32.totalorder %s10, 1
      %p27 = por %p25, %p26
      %p28 = scmp.ne.s32.totalorder %s20, %s23
      %p29 = scmp.eq.s32.totalorder %s10, 0
      %p30 = por %p28, %p29
      %p31 = scmp.ne.s32.totalorder %s20, %s23
      %p32 = scmp.eq.s32.totalorder %s15, 1
      %p33 = por %p31, %p32
      %p34 = scmp.ne.s32.totalorder %s23, %s24
      %p35 = scmp.eq.s32.totalorder %s15, 0
      %p36 = por %p34, %p35
      %p37 = scmp.ne.s32.totalorder %s23, %s24
      %p38 = scmp.eq.s32.totalorder %s16, 1
      %p39 = por %p37, %p38
      %p41 = scmp.ne.s32.totalorder %s24, %s40
      %p42 = scmp.eq.s32.totalorder %s16, 0
      %p43 = por %p41, %p42
      %s44 = ssub.s32 %s10, %s17
      %p45 = scmp.eq.s32.totalorder %s44, 0
      %s47 = sadd.s32 %s46, 1
      %s48 = scalar_select %p45, %s46, %s47
      %p51 = pneg %p45
      %p52 = scmp.eq.s32.totalorder %s10, 1
      %p53 = por %p51, %p52
      %p54 = scmp.ne.s32.totalorder %s46, %s49
      %p55 = scmp.eq.s32.totalorder %s10, 0
      %p56 = por %p54, %p55
      %p57 = scmp.ne.s32.totalorder %s46, %s49
      %p58 = scmp.eq.s32.totalorder %s15, 1
      %p59 = por %p57, %p58
      %p60 = scmp.ne.s32.totalorder %s49, %s50
      %p61 = scmp.eq.s32.totalorder %s15, 0
      %p62 = por %p60, %p61
      %p63 = scmp.ne.s32.totalorder %s49, %s50
      %p64 = scmp.eq.s32.totalorder %s16, 1
      %p65 = por %p63, %p64
      %p67 = scmp.ne.s32.totalorder %s50, %s66
      %p68 = scmp.eq.s32.totalorder %s16, 0
      %p69 = por %p67, %p68
      %p70 = scmp.le.s32.totalorder 1, %s10
      %p71 = scmp.lt.s32.totalorder %s10, 3
      %p72 = pnand %p70, %p71
      %p73 = pneg %p72
      // Predicated region
      $region9: #{tpu_custom_call.1} parent=5 // pred_check
        _
      $region10: #{tpu_custom_call.1} parent=5 // pred_check_branch
        %75 = sbr.rel (%p72) target = $region12
      $region11: #{tpu_custom_call.1} parent=5 // pred_region
        %s76 = ssub.s32 %s10, 1
      $region12: #{tpu_custom_call.1} parent=5 // pred_fallthru
        _
      %p77 = scmp.lt.s32.totalorder %s10, 2
      // Predicated region
      $region13: #{tpu_custom_call.1} parent=5 // pred_check
        %p78 = pneg %p77
      $region14: #{tpu_custom_call.1} parent=5 // pred_check_branch
        %80 = sbr.rel (%p78) target = $region16
      $region15: #{tpu_custom_call.1} parent=5 // pred_region
        // Predicated region
        $region17: #{tpu_custom_call.1} parent=15 // pred_check
          %p81 = pneg %p30
        $region18: #{tpu_custom_call.1} parent=15 // pred_check_branch
          %83 = sbr.rel (%p81) target = $region20
        $region19: #{tpu_custom_call.1} parent=15 // pred_region
          %s84 = sand.u32 %s20, 1
          %s85 = scalar_lea.sflag [#allocation3], %s84
          %s86 = sand.u32 %s20, 1
          %s87 = smul.addr %s86, 64
          %s88 = scalar_lea.vmem [#allocation2], %s87
          %s89 = smul.u32 4, %s10
          %91 = vsyncadd %s85, 0
          %s92 = smul.addr %s89, 2
          %s93 = smul.addr %s92, 8
          %s94 = scalar_lea.hbm %s0, %s93
          %s95 = sshll.u32 %s94, 4
          %s96 = int_to_ptr.hbm [resolvable:$true] %s95
          %s97 = sshll.u32 %s88, 4
          %s98 = int_to_ptr.vmem [resolvable:$true] %s97
          %103 = dma.hbm_to_vmem [thread:$0]  %s96, 1024, %s98, %s85, 128, 128, 8
        $region20: #{tpu_custom_call.1} parent=15 // pred_fallthru
          _
      $region16: #{tpu_custom_call.1} parent=5 // pred_fallthru
        _
      %p104 = scmp.le.s32.totalorder 1, %s10
      %p105 = scmp.lt.s32.totalorder %s10, 3
      %p106 = pnand %p104, %p105
      %p107 = pneg %p106
      // Predicated region
      $region21: #{tpu_custom_call.1} parent=5 // pred_check
        _
      $region22: #{tpu_custom_call.1} parent=5 // pred_check_branch
        %109 = sbr.rel (%p106) target = $region24
      $region23: #{tpu_custom_call.1} parent=5 // pred_region
        %s110 = ssub.s32 %s10, 1
        %s111 = sand.u32 %s23, 1
        %s112 = scalar_lea.sflag [#allocation3], %s111
        %s113 = sand.u32 %s23, 1
        %s114 = smul.addr %s113, 64
        %s115 = scalar_lea.vmem [#allocation2], %s114
        // Predicated region
        $region25: #{tpu_custom_call.1} parent=23 // pred_check
          %p116 = pneg %p36
        $region26: #{tpu_custom_call.1} parent=23 // pred_check_branch
          %118 = sbr.rel (%p116) target = $region28
        $region27: #{tpu_custom_call.1} parent=23 // pred_region
          %120 = dma.done %s112, 1024
        $region28: #{tpu_custom_call.1} parent=23 // pred_fallthru
          _
        %s121 = sand.u32 %s23, 1
        %s122 = scalar_lea.sflag [#allocation3], %s121
        %s123 = sand.u32 %s23, 1
        %s124 = smul.addr %s123, 64
        %s125 = scalar_lea.vmem [#allocation2], %s124
        %p126 = pneg %p36
        %p127 = pneg %p33
        %p128 = pneg %p62
        %p129 = pneg %p59
        %s130 = smul.u32 4, %s15
        %p131 = scmp.lt.s32.totalorder %s130, 7
        %s132 = scalar_select %p131, %s130, 7
        %s133 = smul.addr %s132, 3
        %s134 = smul.addr %s133, 8
        %s135 = scalar_lea.vmem %s1, %s134
        %s136 = smul.u32 4, %s15
        %s137 = smul.u32 4, %s15
        %p138 = scmp.lt.s32.totalorder %s137, 7
        %s139 = scalar_select %p138, %s137, 7
        %s140 = smul.addr %s139, 3
        %s141 = smul.addr %s140, 8
        %s142 = scalar_lea.vmem %s1, %s141
        %s143 = smul.u32 4, %s15
        %v144 = vld [vmem:[%s115] sm:$0xff]
        %v145 = vld [vmem:[%s115 + $0x8] sm:$0xff]
        %v146 = vld [vmem:[%s115 + $0x10] sm:$0xff]
        %v147 = vld [vmem:[%s115 + $0x18] sm:$0xff]
        %v148 = vld [vmem:[%s115 + $0x20] sm:$0xff]
        %v149 = vld [vmem:[%s115 + $0x28] sm:$0xff]
        %v150 = vld [vmem:[%s115 + $0x30] sm:$0xff]
        %v151 = vld [vmem:[%s115 + $0x38] sm:$0xff]
        %153 = vset.pattern.permute.xlu0 0
        %154 = vperm.xlu0 %153, %v144
        %v155 = vpop.permute.xlu0 %154
        %158 = vset.pattern.permute.xlu0 0
        %159 = vperm.xlu0 %158, %v145
        %v160 = vpop.permute.xlu0 %159
        %163 = vset.pattern.permute.xlu0 0
        %164 = vperm.xlu0 %163, %v146
        %v165 = vpop.permute.xlu0 %164
        %168 = vset.pattern.permute.xlu0 0
        %169 = vperm.xlu0 %168, %v147
        %v170 = vpop.permute.xlu0 %169
        %173 = vset.pattern.permute.xlu0 0
        %174 = vperm.xlu0 %173, %v148
        %v175 = vpop.permute.xlu0 %174
        %178 = vset.pattern.permute.xlu0 0
        %179 = vperm.xlu0 %178, %v149
        %v180 = vpop.permute.xlu0 %179
        %183 = vset.pattern.permute.xlu0 0
        %184 = vperm.xlu0 %183, %v150
        %v185 = vpop.permute.xlu0 %184
        %188 = vset.pattern.permute.xlu0 0
        %189 = vperm.xlu0 %188, %v151
        %v190 = vpop.permute.xlu0 %189
        %192 = vset.pattern.permute.xlu0 15
        %193 = vperm.xlu0 %192, %v144
        %v194 = vpop.permute.xlu0 %193
        %196 = vset.pattern.permute.xlu0 15
        %197 = vperm.xlu0 %196, %v145
        %v198 = vpop.permute.xlu0 %197
        %200 = vset.pattern.permute.xlu0 15
        %201 = vperm.xlu0 %200, %v146
        %v202 = vpop.permute.xlu0 %201
        %204 = vset.pattern.permute.xlu0 15
        %205 = vperm.xlu0 %204, %v147
        %v206 = vpop.permute.xlu0 %205
        %208 = vset.pattern.permute.xlu0 15
        %209 = vperm.xlu0 %208, %v148
        %v210 = vpop.permute.xlu0 %209
        %212 = vset.pattern.permute.xlu0 15
        %213 = vperm.xlu0 %212, %v149
        %v214 = vpop.permute.xlu0 %213
        %216 = vset.pattern.permute.xlu0 15
        %217 = vperm.xlu0 %216, %v150
        %v218 = vpop.permute.xlu0 %217
        %220 = vset.pattern.permute.xlu0 15
        %221 = vperm.xlu0 %220, %v151
        %v222 = vpop.permute.xlu0 %221
        %224 = vrot.lane.b32.xlu0 %v144, 2
        %v225 = vpop.permute.xlu0 %224
        %226 = vrot.lane.b32.xlu0 %v145, 2
        %v227 = vpop.permute.xlu0 %226
        %228 = vrot.lane.b32.xlu0 %v146, 2
        %v229 = vpop.permute.xlu0 %228
        %230 = vrot.lane.b32.xlu0 %v147, 2
        %v231 = vpop.permute.xlu0 %230
        %232 = vrot.lane.b32.xlu0 %v148, 2
        %v233 = vpop.permute.xlu0 %232
        %234 = vrot.lane.b32.xlu0 %v149, 2
        %v235 = vpop.permute.xlu0 %234
        %236 = vrot.lane.b32.xlu0 %v150, 2
        %v237 = vpop.permute.xlu0 %236
        %238 = vrot.lane.b32.xlu0 %v151, 2
        %v239 = vpop.permute.xlu0 %238
        %vm248 = vcmask 15360
        %v249 = vsel %vm248, %v155, %v225
        %v250 = vsel %vm248, %v160, %v227
        %v251 = vsel %vm248, %v165, %v229
        %v252 = vsel %vm248, %v170, %v231
        %v253 = vsel %vm248, %v175, %v233
        %v254 = vsel %vm248, %v180, %v235
        %v255 = vsel %vm248, %v185, %v237
        %v256 = vsel %vm248, %v190, %v239
        %vm257 = vcmask 146432
        %v258 = vsel %vm257, %v249, %v194
        %v259 = vsel %vm257, %v250, %v198
        %v260 = vsel %vm257, %v251, %v202
        %v261 = vsel %vm257, %v252, %v206
        %v262 = vsel %vm257, %v253, %v210
        %v263 = vsel %vm257, %v254, %v214
        %v264 = vsel %vm257, %v255, %v218
        %v265 = vsel %vm257, %v256, %v222
        %vm266 = vcmask 171008
        %267 = vst.msk [vmem:[%s142 + $0x1] sm:$0xff] %vm266, %v258
        %268 = vst.msk [vmem:[%s142 + $0x9] sm:$0xff] %vm266, %v259
        %269 = vst.msk [vmem:[%s142 + $0x19] sm:$0xff] %vm266, %v260
        %270 = vst.msk [vmem:[%s142 + $0x21] sm:$0xff] %vm266, %v261
        %271 = vst.msk [vmem:[%s142 + $0x31] sm:$0xff] %vm266, %v262
        %272 = vst.msk [vmem:[%s142 + $0x39] sm:$0xff] %vm266, %v263
        %273 = vst.msk [vmem:[%s142 + $0x49] sm:$0xff] %vm266, %v264
        %274 = vst.msk [vmem:[%s142 + $0x51] sm:$0xff] %vm266, %v265
        %vm275 = vcmask 163840
        %276 = vst.msk [vmem:[%s142] sm:$0x1] %vm275, %v258
        %277 = vst.msk [vmem:[%s142 + $0x18] sm:$0x1] %vm275, %v260
        %278 = vst.msk [vmem:[%s142 + $0x30] sm:$0x1] %vm275, %v262
        %279 = vst.msk [vmem:[%s142 + $0x48] sm:$0x1] %vm275, %v264
        %v280 = vperm.slane %v259, 7
        %v281 = vperm.slane %v261, 7
        %v282 = vperm.slane %v263, 7
        %v283 = vperm.slane %v265, 7
        %vm284 = vcmask 164864
        %285 = vst.msk [vmem:[%s142 + $0x11] sm:$0x3] %vm284, %v280
        %286 = vst.msk [vmem:[%s142 + $0x29] sm:$0x3] %vm284, %v281
        %287 = vst.msk [vmem:[%s142 + $0x41] sm:$0x3] %vm284, %v282
        %288 = vst.msk [vmem:[%s142 + $0x59] sm:$0x3] %vm284, %v283
        %s289 = smul.u32 4, %s15
        %p290 = scmp.lt.s32.totalorder %s289, 7
        %s291 = scalar_select %p290, %s289, 7
        %s292 = smul.addr %s291, 3
        %s293 = smul.addr %s292, 8
        %s294 = scalar_lea.vmem %s1, %s293
        // Predicated region
        $region29: #{tpu_custom_call.1} parent=23 // pred_check
          %p295 = pneg %p59
        $region30: #{tpu_custom_call.1} parent=23 // pred_check_branch
          %297 = sbr.rel (%p295) target = $region32
        $region31: #{tpu_custom_call.1} parent=23 // pred_region
          %s298 = smul.u32 4, %s15
        $region32: #{tpu_custom_call.1} parent=23 // pred_fallthru
          _
      $region24: #{tpu_custom_call.1} parent=5 // pred_fallthru
        _
      %p299 = scmp.le.s32.totalorder 2, %s10
      // Predicated region
      $region33: #{tpu_custom_call.1} parent=5 // pred_check
        %p300 = pneg %p299
      $region34: #{tpu_custom_call.1} parent=5 // pred_check_branch
        %302 = sbr.rel (%p300) target = $region36
      $region35: #{tpu_custom_call.1} parent=5 // pred_region
        %s303 = ssub.s32 %s10, 2
        // Predicated region
        $region37: #{tpu_custom_call.1} parent=35 // pred_check
          %p304 = pneg %p65
        $region38: #{tpu_custom_call.1} parent=35 // pred_check_branch
          %306 = sbr.rel (%p304) target = $region40
        $region39: #{tpu_custom_call.1} parent=35 // pred_region
          %s307 = smul.u32 4, %s16
          %p308 = scmp.lt.s32.totalorder %s307, 7
          %s309 = scalar_select %p308, %s307, 7
          %s310 = smul.addr %s309, 3
          %s311 = smul.addr %s310, 8
          %s312 = scalar_lea.vmem %s1, %s311
        $region40: #{tpu_custom_call.1} parent=35 // pred_fallthru
          _
      $region36: #{tpu_custom_call.1} parent=5 // pred_fallthru
        _
    $region6: #{tpu_custom_call.1} parent=1 // loop_footer
      %s14 = sadd.s32 1, %s10
    $region7: #{tpu_custom_call.1} parent=1 // loop_footer_branch
      %9 = sbr.rel target = $region3
    $region8: #{tpu_custom_call.1} parent=1 // loop_exit
      _
    %313 = vsyncpa [#allocation3], 1
    %s314 = scalar_lea.sflag [#allocation3], 1
    %315 = vsyncpa %s314, 1

</llo_original>
